<compile_context>
chip_gen: v5e
topology: v5e:2x2
jax: 0.10.0
libtpu: 0.0.40
codegen_flags: <defaults>
</compile_context>

<pallas_src>
import functools

import jax
import jax.numpy as jnp
from jax.experimental import pallas as pl
from jax.experimental.pallas import tpu as pltpu

LANES = 128
MAX_TILE_ROWS = 4096   # 4096 x 128 x 4B = 2 MiB per input block


def _round_up(x, m):
    return ((x + m - 1) // m) * m


def _dice_kernel(x_ref, t_ref, o_pt_ref, o_s_ref, *, tile_rows, rows_last):
    """x_ref/t_ref:     (tile_rows, 128) VMEM input tiles.
    o_pt_ref/o_s_ref:   (8, 128) f32 output blocks, VMEM-resident across the
                        grid (their index_map ignores i) -> used directly as
                        vector accumulators for sum(p*t) and sum(p + t)."""
    i = pl.program_id(0)
    nblocks = pl.num_programs(0)

    @pl.when(i == 0)
    def _():
        o_pt_ref[...] = jnp.zeros_like(o_pt_ref)
        o_s_ref[...] = jnp.zeros_like(o_s_ref)

    x = x_ref[...].astype(jnp.float32)
    t = t_ref[...].astype(jnp.float32)
    pred = jax.nn.sigmoid(x)        # EUP transcendental, hidden under DMA
    pt = pred * t                   # numerator contribution
    s = pred + t                    # fused denominator contribution

    def _accumulate(pt_v, s_v):
        # Fold the (tile_rows, 128) tile into the (8, 128) accumulators:
        # pure VPU vreg adds, no XLU work in the hot loop.
        o_pt_ref[...] += jnp.sum(pt_v.reshape(-1, 8, LANES), axis=0)
        o_s_ref[...] += jnp.sum(s_v.reshape(-1, 8, LANES), axis=0)

    if rows_last == tile_rows:
        # Every block is full: single unmasked fast path (static).
        _accumulate(pt, s)
    else:
        # Unmasked fast path for all steady-state blocks.
        @pl.when(i < nblocks - 1)
        def _():
            _accumulate(pt, s)

        # Only the final partial block pays for the mask (row-granular:
        # no element-index arithmetic, no int32 overflow).
        @pl.when(i == nblocks - 1)
        def _():
            rid = jax.lax.broadcasted_iota(jnp.int32, (tile_rows, LANES), 0)
            valid = rid < rows_last
            _accumulate(jnp.where(valid, pt, 0.0), jnp.where(valid, s, 0.0))


@jax.jit
def dice_loss(output, target):
    """Pallas equivalent of DiceLoss().forward(output, target) -> scalar f32."""
    assert output.shape == target.shape
    total = output.size
    flat_x = output.reshape(-1)
    flat_t = target.reshape(-1)

    rows = total // LANES           # full 128-lane rows
    tail = total - rows * LANES     # <=127 leftover elements -> JAX finalize

    inter = jnp.float32(0.0)
    denom_s = jnp.float32(0.0)

    if rows > 0:
        # 128-aligned prefix; when total % 128 == 0 this is a pure bitcast
        # reshape (no extra HBM traffic).
        x2d = flat_x[: rows * LANES].reshape(rows, LANES)
        t2d = flat_t[: rows * LANES].reshape(rows, LANES)

        # Respect min-tile sublane counts for narrow dtypes streamed as-is.
        align = 32 if min(output.dtype.itemsize, target.dtype.itemsize) < 4 else 8
        tile_rows = min(MAX_TILE_ROWS, _round_up(rows, align))
        nblocks = pl.cdiv(rows, tile_rows)
        rows_last = rows - (nblocks - 1) * tile_rows   # rows in final block

        kernel = functools.partial(
            _dice_kernel, tile_rows=tile_rows, rows_last=rows_last)

        part_pt, part_s = pl.pallas_call(
            kernel,
            out_shape=(
                jax.ShapeDtypeStruct((8, LANES), jnp.float32),
                jax.ShapeDtypeStruct((8, LANES), jnp.float32),
            ),
            grid_spec=pltpu.PrefetchScalarGridSpec(
                num_scalar_prefetch=0,
                grid=(nblocks,),
                in_specs=[
                    pl.BlockSpec((tile_rows, LANES), lambda i: (i, 0)),
                    pl.BlockSpec((tile_rows, LANES), lambda i: (i, 0)),
                ],
                out_specs=[
                    pl.BlockSpec((8, LANES), lambda i: (0, 0)),
                    pl.BlockSpec((8, LANES), lambda i: (0, 0)),
                ],
            ),
            compiler_params=pltpu.CompilerParams(
                dimension_semantics=("arbitrary",),
            ),
        )(x2d, t2d)

        # Tiny finalize: cross-lane reductions outside the kernel.
        inter = inter + jnp.sum(part_pt)
        denom_s = denom_s + jnp.sum(part_s)

    if tail > 0:
        # <=127-element lane remainder handled in plain JAX (negligible).
        xt = flat_x[rows * LANES:].astype(jnp.float32)
        tt = flat_t[rows * LANES:].astype(jnp.float32)
        pt_tail = jax.nn.sigmoid(xt)
        inter = inter + jnp.sum(pt_tail * tt)
        denom_s = denom_s + jnp.sum(pt_tail) + jnp.sum(tt)

    denom = denom_s + jnp.float32(1e-07)
    return jnp.float32(1.0) - jnp.float32(2.0) * inter / denom


def _dice_ref(output, target):
    p = jax.nn.sigmoid(output.astype(jnp.float32))
    t = target.astype(jnp.float32)
    return 1.0 - 2.0 * jnp.sum(p * t) / (jnp.sum(p) + jnp.sum(t) + 1e-07)


if __name__ == "__main__":
    key = jax.random.PRNGKey(0)
    k1, k2 = jax.random.split(key)
    # NCHW, matching typical segmentation-logit inputs to DiceLoss.
    x = jax.random.normal(k1, (2, 4, 16, 16), dtype=jnp.float32)        # logits
    tgt = (jax.random.uniform(k2, (2, 4, 16, 16)) > 0.5).astype(jnp.float32)

    loss = dice_loss(x, tgt)
    jax.block_until_ready(loss)

    ref = _dice_ref(x, tgt)
    assert jnp.allclose(loss, ref, atol=1e-5, rtol=1e-5), (loss, ref)
    print("KERNEL_OK")
</pallas_src>

<mosaic_0001>
module attributes {stable_mosaic.version = 11 : i64} {
  func.func @_dice_kernel(%arg0: i32, %arg1: memref<16x128xf32, #tpu.memory_space<vmem>>, %arg2: memref<16x128xf32, #tpu.memory_space<vmem>>, %arg3: memref<8x128xf32, #tpu.memory_space<vmem>>, %arg4: memref<8x128xf32, #tpu.memory_space<vmem>>) attributes {dimension_semantics = [#tpu.dimension_semantics<arbitrary>], iteration_bounds = array<i64: 1>, scalar_prefetch = 0 : i64, scratch_operands = 0 : i64, tpu.core_type = #tpu.core_type<tc>, window_params = [{transform_indices = @transform_0, window_bounds = array<i64: 16, 128>}, {transform_indices = @transform_1, window_bounds = array<i64: 16, 128>}, {pipeline_mode = #tpu.pipeline_mode<synchronous>, transform_indices = @transform_2, window_bounds = array<i64: 8, 128>}, {pipeline_mode = #tpu.pipeline_mode<synchronous>, transform_indices = @transform_3, window_bounds = array<i64: 8, 128>}]} {
    %c0_i32 = arith.constant 0 : i32
    %0 = arith.cmpi eq, %arg0, %c0_i32 : i32
    %1 = arith.extui %0 : i1 to i32
    %c0_i32_0 = arith.constant 0 : i32
    %2 = arith.cmpi ne, %1, %c0_i32_0 : i32
    scf.if %2 {
      %cst_14 = arith.constant 0.000000e+00 : f32
      %22 = vector.broadcast %cst_14 : f32 to vector<8x128xf32>
      %c0_15 = arith.constant 0 : index
      %c0_16 = arith.constant 0 : index
      %23 = vector.load %arg3[%c0_15, %c0_16] : memref<8x128xf32, #tpu.memory_space<vmem>>, vector<8x128xf32>
      tpu.vector_store %arg3[%c0_15, %c0_16], %22 {strides = array<i32>} : memref<8x128xf32, #tpu.memory_space<vmem>>, vector<8x128xf32>,
      %cst_17 = arith.constant 0.000000e+00 : f32
      %24 = vector.broadcast %cst_17 : f32 to vector<8x128xf32>
      %c0_18 = arith.constant 0 : index
      %c0_19 = arith.constant 0 : index
      %25 = vector.load %arg4[%c0_18, %c0_19] : memref<8x128xf32, #tpu.memory_space<vmem>>, vector<8x128xf32>
      tpu.vector_store %arg4[%c0_18, %c0_19], %24 {strides = array<i32>} : memref<8x128xf32, #tpu.memory_space<vmem>>, vector<8x128xf32>,
    } else {
    }
    %c0 = arith.constant 0 : index
    %c0_1 = arith.constant 0 : index
    %3 = vector.load %arg1[%c0, %c0_1] : memref<16x128xf32, #tpu.memory_space<vmem>>, vector<16x128xf32>
    %c0_2 = arith.constant 0 : index
    %c0_3 = arith.constant 0 : index
    %4 = vector.load %arg2[%c0_2, %c0_3] : memref<16x128xf32, #tpu.memory_space<vmem>>, vector<16x128xf32>
    %5 = arith.negf %3 : vector<16x128xf32>
    %6 = math.exp %5 : vector<16x128xf32>
    %cst = arith.constant 1.000000e+00 : f32
    %7 = vector.broadcast %cst : f32 to vector<16x128xf32>
    %8 = arith.addf %7, %6 : vector<16x128xf32>
    %9 = arith.divf %7, %8 : vector<16x128xf32>
    %10 = arith.mulf %9, %4 : vector<16x128xf32>
    %11 = arith.addf %9, %4 : vector<16x128xf32>
    %c0_4 = arith.constant 0 : index
    %c0_5 = arith.constant 0 : index
    %12 = vector.load %arg3[%c0_4, %c0_5] : memref<8x128xf32, #tpu.memory_space<vmem>>, vector<8x128xf32>
    %13 = vector.shape_cast %10 : vector<16x128xf32> to vector<2x8x128xf32>
    %cst_6 = arith.constant dense<0.000000e+00> : vector<8x128xf32>
    %14 = vector.multi_reduction <add>, %13, %cst_6 [0] : vector<2x8x128xf32> to vector<8x128xf32>
    %15 = arith.addf %12, %14 : vector<8x128xf32>
    %c0_7 = arith.constant 0 : index
    %c0_8 = arith.constant 0 : index
    %16 = vector.load %arg3[%c0_7, %c0_8] : memref<8x128xf32, #tpu.memory_space<vmem>>, vector<8x128xf32>
    tpu.vector_store %arg3[%c0_7, %c0_8], %15 {strides = array<i32>} : memref<8x128xf32, #tpu.memory_space<vmem>>, vector<8x128xf32>,
    %c0_9 = arith.constant 0 : index
    %c0_10 = arith.constant 0 : index
    %17 = vector.load %arg4[%c0_9, %c0_10] : memref<8x128xf32, #tpu.memory_space<vmem>>, vector<8x128xf32>
    %18 = vector.shape_cast %11 : vector<16x128xf32> to vector<2x8x128xf32>
    %cst_11 = arith.constant dense<0.000000e+00> : vector<8x128xf32>
    %19 = vector.multi_reduction <add>, %18, %cst_11 [0] : vector<2x8x128xf32> to vector<8x128xf32>
    %20 = arith.addf %17, %19 : vector<8x128xf32>
    %c0_12 = arith.constant 0 : index
    %c0_13 = arith.constant 0 : index
    %21 = vector.load %arg4[%c0_12, %c0_13] : memref<8x128xf32, #tpu.memory_space<vmem>>, vector<8x128xf32>
    tpu.vector_store %arg4[%c0_12, %c0_13], %20 {strides = array<i32>} : memref<8x128xf32, #tpu.memory_space<vmem>>, vector<8x128xf32>,
    return
  }
  func.func @transform_0(%arg0: i32) -> (i32, i32) {
    %c0_i32 = arith.constant 0 : i32
    %c0_i32_0 = arith.constant 0 : i32
    return %arg0, %c0_i32 : i32, i32
  }
  func.func @transform_1(%arg0: i32) -> (i32, i32) {
    %c0_i32 = arith.constant 0 : i32
    %c0_i32_0 = arith.constant 0 : i32
    return %arg0, %c0_i32 : i32, i32
  }
  func.func @transform_2(%arg0: i32) -> (i32, i32) {
    %c0_i32 = arith.constant 0 : i32
    %c0_i32_0 = arith.constant 0 : i32
    %c0_i32_1 = arith.constant 0 : i32
    return %c0_i32, %c0_i32_0 : i32, i32
  }
  func.func @transform_3(%arg0: i32) -> (i32, i32) {
    %c0_i32 = arith.constant 0 : i32
    %c0_i32_0 = arith.constant 0 : i32
    %c0_i32_1 = arith.constant 0 : i32
    return %c0_i32, %c0_i32_0 : i32, i32
  }
}

</mosaic_0001>

<llo_original>
// kernel: dice_loss.1
$region0: #{dice_loss.1}
  #allocation0 [shape = 'u32[]', space=smem, size = 0x4, offset = 0x4, fixed_abs, tag = 'smem constant byte address 0x4 - core index']
  #allocation1 [shape = 'u32[72,128]{1,0:T(1,128)}', space=vmem, size = 0x9000, scoped, tag = 'internal scratch']
  %s0 = inlined_call_operand.vmem [shape: f32[16,128], index: 0, kind: input, shape index: {}]
  %s1 = inlined_call_operand.vmem [shape: f32[16,128], index: 1, kind: input, shape index: {}]
  %s2 = inlined_call_operand.vmem [shape: f32[8,128], index: 2, kind: output, shape index: {0}]
  %s3 = inlined_call_operand.vmem [shape: f32[8,128], index: 3, kind: output, shape index: {1}]
  %4 = xla_tuple %s2, %s3
  %s5 = sld [smem:[#allocation0]]
  $region30: #{dice_loss.1} parent=0
    _
  %s7 = ssub.s32 1, %s5
  %s8 = scalar_select 0, %s7, %s5
  // Predicated region
  $region2: #{dice_loss.1} parent=0 // pred_check
    _
  $region3: #{dice_loss.1} parent=0 // pred_check_branch
    %10 = sbr.rel (0) target = $region5
  $region4: #{dice_loss.1} parent=0 // pred_region
    _
  $region5: #{dice_loss.1} parent=0 // pred_fallthru
    _
  // Predicated region
  $region6: #{dice_loss.1} parent=0 // pred_check
    _
  $region7: #{dice_loss.1} parent=0 // pred_check_branch
    %12 = sbr.rel (0) target = $region9
  $region8: #{dice_loss.1} parent=0 // pred_region
    _
  $region9: #{dice_loss.1} parent=0 // pred_fallthru
    _
  %p13 = scmp.eq.s32.totalorder 0, 0
  // Predicated region
  $region10: #{dice_loss.1} parent=0 // pred_check
    %p14 = pneg %p13
  $region11: #{dice_loss.1} parent=0 // pred_check_branch
    %16 = sbr.rel (%p14) target = $region13
  $region12: #{dice_loss.1} parent=0 // pred_region
    %17 = vst [vmem:[%s2] sm:$0xff] 0.0
    %18 = vst [vmem:[%s3] sm:$0xff] 0.0
  $region13: #{dice_loss.1} parent=0 // pred_fallthru
    _
  %v19 = vld [vmem:[%s0] sm:$0xff]
  %v20 = vld [vmem:[%s0 + $0x8] sm:$0xff]
  %v21 = vld [vmem:[%s1] sm:$0xff]
  %v22 = vld [vmem:[%s1 + $0x8] sm:$0xff]
  %v23 = vxor.u32 %v19, 2147483648
  %v24 = vxor.u32 %v20, 2147483648
  %v25 = vmul.f32 %v23, 1.442695
  %v26 = vpow.pop %v25
  %v27 = vmul.f32 %v24, 1.442695
  %v28 = vpow.pop %v27
  %v29 = vadd.f32 %v26, 1.0
  %v30 = vadd.f32 %v28, 1.0
  %v31 = vrcp.pop %v29
  %v32 = vmul.f32 %v29, %v31
  %v33 = vsub.f32 1.0, %v32
  %v34 = vmul.f32 %v31, %v33
  %v35 = vadd.f32 %v31, %v34
  %vm36 = vweird.f32 %v29
  %vm37 = vweird.f32 %v31
  %vm38 = vmor %vm36, %vm37
  %v39 = vsel %vm38, %v31, %v35
  %v40 = vand.u32 2147483647, %v29
  %vm41 = vcmp.eq.f32.partialorder %v40, 8.507059e+37
  %v42 = vand.u32 %v29, 2147483648
  %v43 = vor.u32 1.1754944e-38, %v42
  %v44 = vsel %vm41, %v43, %v39
  %v45 = vmul.f32 1.0, %v44
  %v46 = vrcp.pop %v30
  %v47 = vmul.f32 %v30, %v46
  %v48 = vsub.f32 1.0, %v47
  %v49 = vmul.f32 %v46, %v48
  %v50 = vadd.f32 %v46, %v49
  %vm51 = vweird.f32 %v30
  %vm52 = vweird.f32 %v46
  %vm53 = vmor %vm51, %vm52
  %v54 = vsel %vm53, %v46, %v50
  %v55 = vand.u32 2147483647, %v30
  %vm56 = vcmp.eq.f32.partialorder %v55, 8.507059e+37
  %v57 = vand.u32 %v30, 2147483648
  %v58 = vor.u32 1.1754944e-38, %v57
  %v59 = vsel %vm56, %v58, %v54
  %v60 = vmul.f32 1.0, %v59
  %v61 = vmul.f32 %v45, %v21
  %v62 = vmul.f32 %v60, %v22
  %v63 = vadd.f32 %v45, %v21
  %v64 = vadd.f32 %v60, %v22
  %v65 = vld [vmem:[%s2] sm:$0xff]
  %v66 = vadd.f32 %v61, %v62
  %v67 = vadd.f32 %v65, %v66
  %68 = vst [vmem:[%s2] sm:$0xff] %v67
  %v69 = vld [vmem:[%s3] sm:$0xff]
  %v70 = vadd.f32 %v63, %v64
  %v71 = vadd.f32 %v69, %v70
  %72 = vst [vmem:[%s3] sm:$0xff] %v71
  // Predicated region
  $region14: #{dice_loss.1} parent=0 // pred_check
    _
  $region15: #{dice_loss.1} parent=0 // pred_check_branch
    %74 = sbr.rel (0) target = $region17
  $region16: #{dice_loss.1} parent=0 // pred_region
    _
  $region17: #{dice_loss.1} parent=0 // pred_fallthru
    _
  // Predicated region
  $region18: #{dice_loss.1} parent=0 // pred_check
    _
  $region19: #{dice_loss.1} parent=0 // pred_check_branch
    %76 = sbr.rel (0) target = $region21
  $region20: #{dice_loss.1} parent=0 // pred_region
    _
  $region21: #{dice_loss.1} parent=0 // pred_fallthru
    _
  // Predicated region
  $region22: #{dice_loss.1} parent=0 // pred_check
    _
  $region23: #{dice_loss.1} parent=0 // pred_check_branch
    %78 = sbr.rel (0) target = $region25
  $region24: #{dice_loss.1} parent=0 // pred_region
    _
  $region25: #{dice_loss.1} parent=0 // pred_fallthru
    _
  // Predicated region
  $region26: #{dice_loss.1} parent=0 // pred_check
    _
  $region27: #{dice_loss.1} parent=0 // pred_check_branch
    %80 = sbr.rel (0) target = $region29
  $region28: #{dice_loss.1} parent=0 // pred_region
    _
  $region29: #{dice_loss.1} parent=0 // pred_fallthru
    _

</llo_original>
